<compile_context>
chip_gen: v5e
topology: v5e:2x2
jax: 0.10.0
libtpu: 0.0.40
codegen_flags: <defaults>
</compile_context>

<pallas_src>
import functools
import math

import jax
import jax.numpy as jnp
from jax.experimental import pallas as pl
from jax.experimental.pallas import tpu as pltpu

CFG = dict(emb_dim=32, context_length=8, n_heads=4, drop_rate=0.0, qkv_bias=False)
EPS = 1e-5          # matches the book's LayerNorm eps
NEG_INF = -1e30     # finite mask sentinel (robust to padded rows)


def _layernorm(x, gamma, beta):
    mean = jnp.mean(x, axis=-1, keepdims=True)
    var = jnp.mean((x - mean) ** 2, axis=-1, keepdims=True)   # unbiased=False
    return (x - mean) * jax.lax.rsqrt(var + EPS) * gamma + beta


def _gelu(x):
    # tanh-approximation GELU, as in the book's GELU module
    c = math.sqrt(2.0 / math.pi)
    return 0.5 * x * (1.0 + jnp.tanh(c * (x + 0.044715 * x ** 3)))


def transformer_block_kernel(x_ref, wqkv_ref, wo_ref, bo_ref,
                             w1_ref, b1_ref, w2_ref, b2_ref,
                             g1_ref, s1_ref, g2_ref, s2_ref,
                             o_ref, *, n_heads, seq_len, ff_bf16):
    R, E = x_ref.shape                 # R = bblk * T rows, already folded in the wrapper
    T = seq_len
    bblk = R // T
    hd = E // n_heads
    scale = 1.0 / math.sqrt(hd)
    bf16 = jnp.bfloat16

    x = x_ref[...]                     # (R, E) f32

    # ---------------- sub-block 1: LayerNorm -> causal MHA -> residual ----------------
    h = _layernorm(x, g1_ref[0], s1_ref[0])                   # f32 (VPU)

    # Fused QKV projection: one (R,E)x(E,3E) MXU matmul; cast the result to bf16 once.
    qkv = jnp.dot(h.astype(bf16), wqkv_ref[...],
                  preferred_element_type=jnp.float32).astype(bf16)       # (R, 3E)

    # Per-sequence causal mask, shared by every sequence in the block and every head.
    ri = jax.lax.broadcasted_iota(jnp.int32, (bblk, T, T), 1)
    ci = jax.lax.broadcasted_iota(jnp.int32, (bblk, T, T), 2)
    allowed = ci <= ri

    ctx_parts = []
    for hi in range(n_heads):          # static unroll; n_heads is small
        qh = qkv[:, hi * hd:(hi + 1) * hd].reshape(bblk, T, hd)            # bf16
        kh = qkv[:, E + hi * hd:E + (hi + 1) * hd].reshape(bblk, T, hd)
        vh = qkv[:, 2 * E + hi * hd:2 * E + (hi + 1) * hd].reshape(bblk, T, hd)

        logits = jnp.einsum('bqd,bkd->bqk', qh, kh,
                            preferred_element_type=jnp.float32) * scale    # (bblk,T,T)
        logits = jnp.where(allowed, logits, NEG_INF)
        logits = logits - jnp.max(logits, axis=-1, keepdims=True)
        p = jnp.exp(logits)
        denom = jnp.sum(p, axis=-1, keepdims=True)
        attn = p * pl.reciprocal(denom, approx=True)                       # EUP recip

        ctx = jnp.einsum('bqk,bkd->bqd', attn.astype(bf16), vh,
                         preferred_element_type=jnp.float32)               # (bblk,T,hd)
        ctx_parts.append(ctx.reshape(R, hd))
    ctx = jnp.concatenate(ctx_parts, axis=-1)                              # (R, E) f32

    att_out = jnp.dot(ctx.astype(bf16), wo_ref[...],
                      preferred_element_type=jnp.float32) + bo_ref[0]      # (R, E)
    x1 = x + att_out                   # drop_shortcut with p=0.0 is identity

    # ---------------- sub-block 2: LayerNorm -> FeedForward (GELU) -> residual --------
    h2 = _layernorm(x1, g2_ref[0], s2_ref[0])
    ff = jnp.dot(h2.astype(bf16), w1_ref[...],
                 preferred_element_type=jnp.float32) + b1_ref[0]           # (R, H) f32
    if ff_bf16:
        ff = _gelu(ff.astype(bf16))    # bf16 VPU/EUP on v6e/v7x
    else:
        ff = _gelu(ff).astype(bf16)    # v5e: f32 VPU/EUP, cast only at the MXU boundary
    ff = jnp.dot(ff, w2_ref[...],
                 preferred_element_type=jnp.float32) + b2_ref[0]

    o_ref[...] = x1 + ff


def _tpu_kind():
    try:
        return jax.devices()[0].device_kind.lower()
    except Exception:
        return ""


def _pick_batch_block(B, T, kind):
    """Generation-aware batch tile: one big step on single-TC chips (v5e/v6e); split
    only on v7x (2 TCs) and only when each core still sees >= 128 rows."""
    is_v7 = ("v7" in kind) or ("7x" in kind)
    rows_target = 128 if "v5" in kind else 256          # MXU M-fill target
    bblk = max(1, min(B, pl.cdiv(rows_target, T)))
    if is_v7 and (B * T) >= 256 and (B // 2) * T >= 128:
        bblk = min(bblk, pl.cdiv(B, 2))                 # give both v7x TCs work
    while B % bblk:                                     # keep the batch tiling exact
        bblk -= 1
    return bblk


def transformer_block(x, params, n_heads):
    B, T, E = x.shape
    H = params["w1"].shape[1]                 # ff hidden dim = 4*E
    kind = _tpu_kind()
    is_v7 = ("v7" in kind) or ("7x" in kind)
    bblk = _pick_batch_block(B, T, kind)
    grid = (B // bblk,)
    ff_bf16 = "v5" not in kind                # v5e has no bf16 VPU/EUP
    vmem_limit = (32 if is_v7 else 64) * 1024 * 1024

    # Fold batch/time at HBM level (free reshape) so the kernel sees plain 2-D rows.
    x2d = x.reshape(B * T, E)

    # Fuse + pre-cast the matmul weights to bf16 (halves their DMA bytes).
    wqkv = jnp.concatenate([params["wq"], params["wk"], params["wv"]],
                           axis=1).astype(jnp.bfloat16)      # (E, 3E)
    wo = params["wo"].astype(jnp.bfloat16)
    w1 = params["w1"].astype(jnp.bfloat16)
    w2 = params["w2"].astype(jnp.bfloat16)

    kernel = functools.partial(transformer_block_kernel,
                               n_heads=n_heads, seq_len=T, ff_bf16=ff_bf16)

    def fullspec(shape):                      # whole-array (2-D) block, resident
        return pl.BlockSpec(shape, lambda b: (0, 0))

    in_specs = [
        pl.BlockSpec((bblk * T, E), lambda b: (b, 0)),       # x rows for this step
        fullspec((E, 3 * E)),                                # fused Wqkv (bf16)
        fullspec((E, E)), fullspec((1, E)),                  # Wo (bf16), bo (f32)
        fullspec((E, H)), fullspec((1, H)),                  # W1 (bf16), b1 (f32)
        fullspec((H, E)), fullspec((1, E)),                  # W2 (bf16), b2 (f32)
        fullspec((1, E)), fullspec((1, E)),                  # ln1 gamma, beta
        fullspec((1, E)), fullspec((1, E)),                  # ln2 gamma, beta
    ]
    out2d = pl.pallas_call(
        kernel,
        out_shape=jax.ShapeDtypeStruct((B * T, E), jnp.float32),
        grid=grid,
        in_specs=in_specs,
        out_specs=pl.BlockSpec((bblk * T, E), lambda b: (b, 0)),
        compiler_params=pltpu.CompilerParams(
            dimension_semantics=("parallel",),
            vmem_limit_bytes=vmem_limit),
    )(x2d, wqkv, wo, params["bo"], w1, params["b1"], w2, params["b2"],
      params["g1"], params["s1"], params["g2"], params["s2"])
    return out2d.reshape(B, T, E)


def make_params(key, emb_dim):
    H = 4 * emb_dim
    ks = jax.random.split(key, 8)
    std = 0.02
    return dict(
        wq=std * jax.random.normal(ks[0], (emb_dim, emb_dim), jnp.float32),
        wk=std * jax.random.normal(ks[1], (emb_dim, emb_dim), jnp.float32),
        wv=std * jax.random.normal(ks[2], (emb_dim, emb_dim), jnp.float32),
        wo=std * jax.random.normal(ks[3], (emb_dim, emb_dim), jnp.float32),
        bo=std * jax.random.normal(ks[4], (1, emb_dim), jnp.float32),
        w1=std * jax.random.normal(ks[5], (emb_dim, H), jnp.float32),
        b1=std * jax.random.normal(ks[6], (1, H), jnp.float32),
        w2=std * jax.random.normal(ks[7], (H, emb_dim), jnp.float32),
        b2=jnp.zeros((1, emb_dim), jnp.float32),
        g1=jnp.ones((1, emb_dim), jnp.float32),
        s1=jnp.zeros((1, emb_dim), jnp.float32),
        g2=jnp.ones((1, emb_dim), jnp.float32),
        s2=jnp.zeros((1, emb_dim), jnp.float32),
    )


def reference_block(x, p, n_heads):
    """Pure-JAX f32 reference mirroring the PyTorch forward (drop_rate=0)."""
    B, T, E = x.shape
    hd = E // n_heads
    h = _layernorm(x, p["g1"][0], p["s1"][0])
    q = h @ p["wq"]
    k = h @ p["wk"]
    v = h @ p["wv"]
    q = q.reshape(B, T, n_heads, hd).transpose(0, 2, 1, 3)
    k = k.reshape(B, T, n_heads, hd).transpose(0, 2, 1, 3)
    v = v.reshape(B, T, n_heads, hd).transpose(0, 2, 1, 3)
    s = jnp.einsum("bhqd,bhkd->bhqk", q, k) / math.sqrt(hd)
    mask = jnp.triu(jnp.ones((T, T), bool), k=1)
    s = jnp.where(mask, -jnp.inf, s)
    a = jax.nn.softmax(s, axis=-1)
    ctx = jnp.einsum("bhqk,bhkd->bhqd", a, v).transpose(0, 2, 1, 3).reshape(B, T, E)
    x1 = x + (ctx @ p["wo"] + p["bo"][0])
    h2 = _layernorm(x1, p["g2"][0], p["s2"][0])
    ff = _gelu(h2 @ p["w1"] + p["b1"][0]) @ p["w2"] + p["b2"][0]
    return x1 + ff


if __name__ == "__main__":
    B, T, E = 2, CFG["context_length"], CFG["emb_dim"]
    key = jax.random.PRNGKey(0)
    kx, kp = jax.random.split(key)
    x = jax.random.normal(kx, (B, T, E), jnp.float32)
    params = make_params(kp, E)

    out = transformer_block(x, params, CFG["n_heads"])
    out = jax.block_until_ready(out)

    ref = reference_block(x, params, CFG["n_heads"])
    assert out.shape == (B, T, E)
    assert bool(jnp.all(jnp.isfinite(out)))
    # bf16 MXU operands + approx reciprocal in the kernel vs the f32 reference
    assert bool(jnp.allclose(out, ref, rtol=1e-2, atol=1e-2)), "mismatch vs JAX reference"
    print("KERNEL_OK")
</pallas_src>

<mosaic_0001>
module attributes {stable_mosaic.version = 11 : i64} {
  func.func @transformer_block_kernel(%arg0: i32, %arg1: memref<16x32xf32, #tpu.memory_space<vmem>>, %arg2: memref<32x96xbf16, #tpu.memory_space<vmem>>, %arg3: memref<32x32xbf16, #tpu.memory_space<vmem>>, %arg4: memref<1x32xf32, #tpu.memory_space<vmem>>, %arg5: memref<32x128xbf16, #tpu.memory_space<vmem>>, %arg6: memref<1x128xf32, #tpu.memory_space<vmem>>, %arg7: memref<128x32xbf16, #tpu.memory_space<vmem>>, %arg8: memref<1x32xf32, #tpu.memory_space<vmem>>, %arg9: memref<1x32xf32, #tpu.memory_space<vmem>>, %arg10: memref<1x32xf32, #tpu.memory_space<vmem>>, %arg11: memref<1x32xf32, #tpu.memory_space<vmem>>, %arg12: memref<1x32xf32, #tpu.memory_space<vmem>>, %arg13: memref<16x32xf32, #tpu.memory_space<vmem>>) attributes {dimension_semantics = [#tpu.dimension_semantics<parallel>], iteration_bounds = array<i64: 1>, scalar_prefetch = 0 : i64, scratch_operands = 0 : i64, tpu.core_type = #tpu.core_type<tc>, window_params = [{transform_indices = @transform_0, window_bounds = array<i64: 16, 32>}, {pipeline_mode = #tpu.pipeline_mode<synchronous>, transform_indices = @transform_1, window_bounds = array<i64: 32, 96>}, {pipeline_mode = #tpu.pipeline_mode<synchronous>, transform_indices = @transform_2, window_bounds = array<i64: 32, 32>}, {pipeline_mode = #tpu.pipeline_mode<synchronous>, transform_indices = @transform_3, window_bounds = array<i64: 1, 32>}, {pipeline_mode = #tpu.pipeline_mode<synchronous>, transform_indices = @transform_4, window_bounds = array<i64: 32, 128>}, {pipeline_mode = #tpu.pipeline_mode<synchronous>, transform_indices = @transform_5, window_bounds = array<i64: 1, 128>}, {pipeline_mode = #tpu.pipeline_mode<synchronous>, transform_indices = @transform_6, window_bounds = array<i64: 128, 32>}, {pipeline_mode = #tpu.pipeline_mode<synchronous>, transform_indices = @transform_7, window_bounds = array<i64: 1, 32>}, {pipeline_mode = #tpu.pipeline_mode<synchronous>, transform_indices = @transform_8, window_bounds = array<i64: 1, 32>}, {pipeline_mode = #tpu.pipeline_mode<synchronous>, transform_indices = @transform_9, window_bounds = array<i64: 1, 32>}, {pipeline_mode = #tpu.pipeline_mode<synchronous>, transform_indices = @transform_10, window_bounds = array<i64: 1, 32>}, {pipeline_mode = #tpu.pipeline_mode<synchronous>, transform_indices = @transform_11, window_bounds = array<i64: 1, 32>}, {transform_indices = @transform_12, window_bounds = array<i64: 16, 32>}]} {
    %c0 = arith.constant 0 : index
    %c0_0 = arith.constant 0 : index
    %0 = vector.load %arg1[%c0, %c0_0] : memref<16x32xf32, #tpu.memory_space<vmem>>, vector<16x32xf32>
    %c0_1 = arith.constant 0 : index
    %c0_2 = arith.constant 0 : index
    %1 = vector.load %arg9[%c0_1, %c0_2] : memref<1x32xf32, #tpu.memory_space<vmem>>, vector<1x32xf32>
    %2 = vector.shape_cast %1 : vector<1x32xf32> to vector<32xf32>
    %c0_3 = arith.constant 0 : index
    %c0_4 = arith.constant 0 : index
    %3 = vector.load %arg10[%c0_3, %c0_4] : memref<1x32xf32, #tpu.memory_space<vmem>>, vector<1x32xf32>
    %4 = vector.shape_cast %3 : vector<1x32xf32> to vector<32xf32>
    %cst = arith.constant dense<0.000000e+00> : vector<16xf32>
    %5 = vector.multi_reduction <add>, %0, %cst [1] : vector<16x32xf32> to vector<16xf32>
    %6 = vector.shape_cast %5 : vector<16xf32> to vector<16x1xf32>
    %cst_5 = arith.constant 3.200000e+01 : f32
    %7 = vector.broadcast %cst_5 : f32 to vector<16x1xf32>
    %8 = arith.divf %6, %7 : vector<16x1xf32>
    %9 = vector.broadcast %8 : vector<16x1xf32> to vector<16x32xf32>
    %10 = arith.subf %0, %9 : vector<16x32xf32>
    %11 = arith.mulf %10, %10 : vector<16x32xf32>
    %cst_6 = arith.constant dense<0.000000e+00> : vector<16xf32>
    %12 = vector.multi_reduction <add>, %11, %cst_6 [1] : vector<16x32xf32> to vector<16xf32>
    %13 = vector.shape_cast %12 : vector<16xf32> to vector<16x1xf32>
    %cst_7 = arith.constant 3.200000e+01 : f32
    %14 = vector.broadcast %cst_7 : f32 to vector<16x1xf32>
    %15 = arith.divf %13, %14 : vector<16x1xf32>
    %16 = vector.broadcast %8 : vector<16x1xf32> to vector<16x32xf32>
    %17 = arith.subf %0, %16 : vector<16x32xf32>
    %cst_8 = arith.constant 9.99999974E-6 : f32
    %18 = vector.broadcast %cst_8 : f32 to vector<16x1xf32>
    %19 = arith.addf %15, %18 : vector<16x1xf32>
    %20 = math.rsqrt %19 : vector<16x1xf32>
    %21 = vector.broadcast %20 : vector<16x1xf32> to vector<16x32xf32>
    %22 = arith.mulf %17, %21 : vector<16x32xf32>
    %23 = vector.shape_cast %2 : vector<32xf32> to vector<1x32xf32>
    %24 = vector.broadcast %23 : vector<1x32xf32> to vector<16x32xf32>
    %25 = arith.mulf %22, %24 : vector<16x32xf32>
    %26 = vector.shape_cast %4 : vector<32xf32> to vector<1x32xf32>
    %27 = vector.broadcast %26 : vector<1x32xf32> to vector<16x32xf32>
    %28 = arith.addf %25, %27 : vector<16x32xf32>
    %29 = arith.truncf %28 : vector<16x32xf32> to vector<16x32xbf16>
    %c0_9 = arith.constant 0 : index
    %c0_10 = arith.constant 0 : index
    %30 = vector.load %arg2[%c0_9, %c0_10] : memref<32x96xbf16, #tpu.memory_space<vmem>>, vector<32x96xbf16>
    %cst_11 = arith.constant dense<0.000000e+00> : vector<16x96xf32>
    %31 = tpu.matmul %29, %30, %cst_11 {dimension_numbers = #tpu.dot_dimension_numbers<[1], [0], [0], [1], [0, 0, 1, 1], [], []>} : vector<16x32xbf16>, vector<32x96xbf16>, vector<16x96xf32> -> vector<16x96xf32>
    %32 = arith.truncf %31 : vector<16x96xf32> to vector<16x96xbf16>
    %33 = tpu.iota {dimensions = array<i32: 1>} : vector<2x8x8xi32>
    %34 = tpu.iota {dimensions = array<i32: 2>} : vector<2x8x8xi32>
    %35 = arith.cmpi sle, %34, %33 : vector<2x8x8xi32>
    %36 = vector.extract_strided_slice %32 {offsets = [0, 0], sizes = [16, 8], strides = [1, 1]} : vector<16x96xbf16> to vector<16x8xbf16>
    %37 = vector.shape_cast %36 : vector<16x8xbf16> to vector<2x8x8xbf16>
    %38 = vector.extract_strided_slice %32 {offsets = [0, 32], sizes = [16, 8], strides = [1, 1]} : vector<16x96xbf16> to vector<16x8xbf16>
    %39 = vector.shape_cast %38 : vector<16x8xbf16> to vector<2x8x8xbf16>
    %40 = vector.extract_strided_slice %32 {offsets = [0, 64], sizes = [16, 8], strides = [1, 1]} : vector<16x96xbf16> to vector<16x8xbf16>
    %41 = vector.shape_cast %40 : vector<16x8xbf16> to vector<2x8x8xbf16>
    "tpu.trace_start"() <{level = 10 : i32, message = "bqd,bkd->bqk"}> : () -> ()
    %cst_12 = arith.constant dense<0.000000e+00> : vector<2x8x8xf32>
    %42 = tpu.matmul %37, %39, %cst_12 {dimension_numbers = #tpu.dot_dimension_numbers<[2], [2], [1], [1], [0, 0, 0, 1, 1, 1], [0], [0]>} : vector<2x8x8xbf16>, vector<2x8x8xbf16>, vector<2x8x8xf32> -> vector<2x8x8xf32>
    "tpu.trace_stop"() : () -> ()
    %cst_13 = arith.constant 0.353553385 : f32
    %43 = vector.broadcast %cst_13 : f32 to vector<2x8x8xf32>
    %44 = arith.mulf %42, %43 : vector<2x8x8xf32>
    %cst_14 = arith.constant -1.000000e+30 : f32
    %45 = vector.broadcast %cst_14 : f32 to vector<2x8x8xf32>
    %46 = arith.select %35, %44, %45 : vector<2x8x8xi1>, vector<2x8x8xf32>
    %cst_15 = arith.constant dense<0xFF800000> : vector<2x8xf32>
    %47 = vector.multi_reduction <maximumf>, %46, %cst_15 [2] : vector<2x8x8xf32> to vector<2x8xf32>
    %48 = vector.shape_cast %47 : vector<2x8xf32> to vector<2x8x1xf32>
    %49 = vector.broadcast %48 : vector<2x8x1xf32> to vector<2x8x8xf32>
    %50 = arith.subf %46, %49 : vector<2x8x8xf32>
    %51 = math.exp %50 : vector<2x8x8xf32>
    %cst_16 = arith.constant dense<0.000000e+00> : vector<2x8xf32>
    %52 = vector.multi_reduction <add>, %51, %cst_16 [2] : vector<2x8x8xf32> to vector<2x8xf32>
    %53 = vector.shape_cast %52 : vector<2x8xf32> to vector<2x8x1xf32>
    %54 = tpu.reciprocal %53 {approx = true} : vector<2x8x1xf32> -> vector<2x8x1xf32>
    %55 = vector.broadcast %54 : vector<2x8x1xf32> to vector<2x8x8xf32>
    %56 = arith.mulf %51, %55 : vector<2x8x8xf32>
    %57 = arith.truncf %56 : vector<2x8x8xf32> to vector<2x8x8xbf16>
    "tpu.trace_start"() <{level = 10 : i32, message = "bqk,bkd->bqd"}> : () -> ()
    %cst_17 = arith.constant dense<0.000000e+00> : vector<2x8x8xf32>
    %58 = tpu.matmul %57, %41, %cst_17 {dimension_numbers = #tpu.dot_dimension_numbers<[2], [1], [1], [2], [0, 0, 0, 1, 1, 2], [0], [0]>} : vector<2x8x8xbf16>, vector<2x8x8xbf16>, vector<2x8x8xf32> -> vector<2x8x8xf32>
    "tpu.trace_stop"() : () -> ()
    %59 = vector.shape_cast %58 : vector<2x8x8xf32> to vector<16x8xf32>
    %60 = vector.extract_strided_slice %32 {offsets = [0, 8], sizes = [16, 8], strides = [1, 1]} : vector<16x96xbf16> to vector<16x8xbf16>
    %61 = vector.shape_cast %60 : vector<16x8xbf16> to vector<2x8x8xbf16>
    %62 = vector.extract_strided_slice %32 {offsets = [0, 40], sizes = [16, 8], strides = [1, 1]} : vector<16x96xbf16> to vector<16x8xbf16>
    %63 = vector.shape_cast %62 : vector<16x8xbf16> to vector<2x8x8xbf16>
    %64 = vector.extract_strided_slice %32 {offsets = [0, 72], sizes = [16, 8], strides = [1, 1]} : vector<16x96xbf16> to vector<16x8xbf16>
    %65 = vector.shape_cast %64 : vector<16x8xbf16> to vector<2x8x8xbf16>
    "tpu.trace_start"() <{level = 10 : i32, message = "bqd,bkd->bqk"}> : () -> ()
    %cst_18 = arith.constant dense<0.000000e+00> : vector<2x8x8xf32>
    %66 = tpu.matmul %61, %63, %cst_18 {dimension_numbers = #tpu.dot_dimension_numbers<[2], [2], [1], [1], [0, 0, 0, 1, 1, 1], [0], [0]>} : vector<2x8x8xbf16>, vector<2x8x8xbf16>, vector<2x8x8xf32> -> vector<2x8x8xf32>
    "tpu.trace_stop"() : () -> ()
    %cst_19 = arith.constant 0.353553385 : f32
    %67 = vector.broadcast %cst_19 : f32 to vector<2x8x8xf32>
    %68 = arith.mulf %66, %67 : vector<2x8x8xf32>
    %cst_20 = arith.constant -1.000000e+30 : f32
    %69 = vector.broadcast %cst_20 : f32 to vector<2x8x8xf32>
    %70 = arith.select %35, %68, %69 : vector<2x8x8xi1>, vector<2x8x8xf32>
    %cst_21 = arith.constant dense<0xFF800000> : vector<2x8xf32>
    %71 = vector.multi_reduction <maximumf>, %70, %cst_21 [2] : vector<2x8x8xf32> to vector<2x8xf32>
    %72 = vector.shape_cast %71 : vector<2x8xf32> to vector<2x8x1xf32>
    %73 = vector.broadcast %72 : vector<2x8x1xf32> to vector<2x8x8xf32>
    %74 = arith.subf %70, %73 : vector<2x8x8xf32>
    %75 = math.exp %74 : vector<2x8x8xf32>
    %cst_22 = arith.constant dense<0.000000e+00> : vector<2x8xf32>
    %76 = vector.multi_reduction <add>, %75, %cst_22 [2] : vector<2x8x8xf32> to vector<2x8xf32>
    %77 = vector.shape_cast %76 : vector<2x8xf32> to vector<2x8x1xf32>
    %78 = tpu.reciprocal %77 {approx = true} : vector<2x8x1xf32> -> vector<2x8x1xf32>
    %79 = vector.broadcast %78 : vector<2x8x1xf32> to vector<2x8x8xf32>
    %80 = arith.mulf %75, %79 : vector<2x8x8xf32>
    %81 = arith.truncf %80 : vector<2x8x8xf32> to vector<2x8x8xbf16>
    "tpu.trace_start"() <{level = 10 : i32, message = "bqk,bkd->bqd"}> : () -> ()
    %cst_23 = arith.constant dense<0.000000e+00> : vector<2x8x8xf32>
    %82 = tpu.matmul %81, %65, %cst_23 {dimension_numbers = #tpu.dot_dimension_numbers<[2], [1], [1], [2], [0, 0, 0, 1, 1, 2], [0], [0]>} : vector<2x8x8xbf16>, vector<2x8x8xbf16>, vector<2x8x8xf32> -> vector<2x8x8xf32>
    "tpu.trace_stop"() : () -> ()
    %83 = vector.shape_cast %82 : vector<2x8x8xf32> to vector<16x8xf32>
    %84 = vector.extract_strided_slice %32 {offsets = [0, 16], sizes = [16, 8], strides = [1, 1]} : vector<16x96xbf16> to vector<16x8xbf16>
    %85 = vector.shape_cast %84 : vector<16x8xbf16> to vector<2x8x8xbf16>
    %86 = vector.extract_strided_slice %32 {offsets = [0, 48], sizes = [16, 8], strides = [1, 1]} : vector<16x96xbf16> to vector<16x8xbf16>
    %87 = vector.shape_cast %86 : vector<16x8xbf16> to vector<2x8x8xbf16>
    %88 = vector.extract_strided_slice %32 {offsets = [0, 80], sizes = [16, 8], strides = [1, 1]} : vector<16x96xbf16> to vector<16x8xbf16>
    %89 = vector.shape_cast %88 : vector<16x8xbf16> to vector<2x8x8xbf16>
    "tpu.trace_start"() <{level = 10 : i32, message = "bqd,bkd->bqk"}> : () -> ()
    %cst_24 = arith.constant dense<0.000000e+00> : vector<2x8x8xf32>
    %90 = tpu.matmul %85, %87, %cst_24 {dimension_numbers = #tpu.dot_dimension_numbers<[2], [2], [1], [1], [0, 0, 0, 1, 1, 1], [0], [0]>} : vector<2x8x8xbf16>, vector<2x8x8xbf16>, vector<2x8x8xf32> -> vector<2x8x8xf32>
    "tpu.trace_stop"() : () -> ()
    %cst_25 = arith.constant 0.353553385 : f32
    %91 = vector.broadcast %cst_25 : f32 to vector<2x8x8xf32>
    %92 = arith.mulf %90, %91 : vector<2x8x8xf32>
    %cst_26 = arith.constant -1.000000e+30 : f32
    %93 = vector.broadcast %cst_26 : f32 to vector<2x8x8xf32>
    %94 = arith.select %35, %92, %93 : vector<2x8x8xi1>, vector<2x8x8xf32>
    %cst_27 = arith.constant dense<0xFF800000> : vector<2x8xf32>
    %95 = vector.multi_reduction <maximumf>, %94, %cst_27 [2] : vector<2x8x8xf32> to vector<2x8xf32>
    %96 = vector.shape_cast %95 : vector<2x8xf32> to vector<2x8x1xf32>
    %97 = vector.broadcast %96 : vector<2x8x1xf32> to vector<2x8x8xf32>
    %98 = arith.subf %94, %97 : vector<2x8x8xf32>
    %99 = math.exp %98 : vector<2x8x8xf32>
    %cst_28 = arith.constant dense<0.000000e+00> : vector<2x8xf32>
    %100 = vector.multi_reduction <add>, %99, %cst_28 [2] : vector<2x8x8xf32> to vector<2x8xf32>
    %101 = vector.shape_cast %100 : vector<2x8xf32> to vector<2x8x1xf32>
    %102 = tpu.reciprocal %101 {approx = true} : vector<2x8x1xf32> -> vector<2x8x1xf32>
    %103 = vector.broadcast %102 : vector<2x8x1xf32> to vector<2x8x8xf32>
    %104 = arith.mulf %99, %103 : vector<2x8x8xf32>
    %105 = arith.truncf %104 : vector<2x8x8xf32> to vector<2x8x8xbf16>
    "tpu.trace_start"() <{level = 10 : i32, message = "bqk,bkd->bqd"}> : () -> ()
    %cst_29 = arith.constant dense<0.000000e+00> : vector<2x8x8xf32>
    %106 = tpu.matmul %105, %89, %cst_29 {dimension_numbers = #tpu.dot_dimension_numbers<[2], [1], [1], [2], [0, 0, 0, 1, 1, 2], [0], [0]>} : vector<2x8x8xbf16>, vector<2x8x8xbf16>, vector<2x8x8xf32> -> vector<2x8x8xf32>
    "tpu.trace_stop"() : () -> ()
    %107 = vector.shape_cast %106 : vector<2x8x8xf32> to vector<16x8xf32>
    %108 = vector.extract_strided_slice %32 {offsets = [0, 24], sizes = [16, 8], strides = [1, 1]} : vector<16x96xbf16> to vector<16x8xbf16>
    %109 = vector.shape_cast %108 : vector<16x8xbf16> to vector<2x8x8xbf16>
    %110 = vector.extract_strided_slice %32 {offsets = [0, 56], sizes = [16, 8], strides = [1, 1]} : vector<16x96xbf16> to vector<16x8xbf16>
    %111 = vector.shape_cast %110 : vector<16x8xbf16> to vector<2x8x8xbf16>
    %112 = vector.extract_strided_slice %32 {offsets = [0, 88], sizes = [16, 8], strides = [1, 1]} : vector<16x96xbf16> to vector<16x8xbf16>
    %113 = vector.shape_cast %112 : vector<16x8xbf16> to vector<2x8x8xbf16>
    "tpu.trace_start"() <{level = 10 : i32, message = "bqd,bkd->bqk"}> : () -> ()
    %cst_30 = arith.constant dense<0.000000e+00> : vector<2x8x8xf32>
    %114 = tpu.matmul %109, %111, %cst_30 {dimension_numbers = #tpu.dot_dimension_numbers<[2], [2], [1], [1], [0, 0, 0, 1, 1, 1], [0], [0]>} : vector<2x8x8xbf16>, vector<2x8x8xbf16>, vector<2x8x8xf32> -> vector<2x8x8xf32>
    "tpu.trace_stop"() : () -> ()
    %cst_31 = arith.constant 0.353553385 : f32
    %115 = vector.broadcast %cst_31 : f32 to vector<2x8x8xf32>
    %116 = arith.mulf %114, %115 : vector<2x8x8xf32>
    %cst_32 = arith.constant -1.000000e+30 : f32
    %117 = vector.broadcast %cst_32 : f32 to vector<2x8x8xf32>
    %118 = arith.select %35, %116, %117 : vector<2x8x8xi1>, vector<2x8x8xf32>
    %cst_33 = arith.constant dense<0xFF800000> : vector<2x8xf32>
    %119 = vector.multi_reduction <maximumf>, %118, %cst_33 [2] : vector<2x8x8xf32> to vector<2x8xf32>
    %120 = vector.shape_cast %119 : vector<2x8xf32> to vector<2x8x1xf32>
    %121 = vector.broadcast %120 : vector<2x8x1xf32> to vector<2x8x8xf32>
    %122 = arith.subf %118, %121 : vector<2x8x8xf32>
    %123 = math.exp %122 : vector<2x8x8xf32>
    %cst_34 = arith.constant dense<0.000000e+00> : vector<2x8xf32>
    %124 = vector.multi_reduction <add>, %123, %cst_34 [2] : vector<2x8x8xf32> to vector<2x8xf32>
    %125 = vector.shape_cast %124 : vector<2x8xf32> to vector<2x8x1xf32>
    %126 = tpu.reciprocal %125 {approx = true} : vector<2x8x1xf32> -> vector<2x8x1xf32>
    %127 = vector.broadcast %126 : vector<2x8x1xf32> to vector<2x8x8xf32>
    %128 = arith.mulf %123, %127 : vector<2x8x8xf32>
    %129 = arith.truncf %128 : vector<2x8x8xf32> to vector<2x8x8xbf16>
    "tpu.trace_start"() <{level = 10 : i32, message = "bqk,bkd->bqd"}> : () -> ()
    %cst_35 = arith.constant dense<0.000000e+00> : vector<2x8x8xf32>
    %130 = tpu.matmul %129, %113, %cst_35 {dimension_numbers = #tpu.dot_dimension_numbers<[2], [1], [1], [2], [0, 0, 0, 1, 1, 2], [0], [0]>} : vector<2x8x8xbf16>, vector<2x8x8xbf16>, vector<2x8x8xf32> -> vector<2x8x8xf32>
    "tpu.trace_stop"() : () -> ()
    %131 = vector.shape_cast %130 : vector<2x8x8xf32> to vector<16x8xf32>
    %132 = tpu.concatenate %59, %83, %107, %131 in 1 : vector<16x8xf32>, vector<16x8xf32>, vector<16x8xf32>, vector<16x8xf32> -> vector<16x32xf32>
    %133 = arith.truncf %132 : vector<16x32xf32> to vector<16x32xbf16>
    %c0_36 = arith.constant 0 : index
    %c0_37 = arith.constant 0 : index
    %134 = vector.load %arg3[%c0_36, %c0_37] : memref<32x32xbf16, #tpu.memory_space<vmem>>, vector<32x32xbf16>
    %cst_38 = arith.constant dense<0.000000e+00> : vector<16x32xf32>
    %135 = tpu.matmul %133, %134, %cst_38 {dimension_numbers = #tpu.dot_dimension_numbers<[1], [0], [0], [1], [0, 0, 1, 1], [], []>} : vector<16x32xbf16>, vector<32x32xbf16>, vector<16x32xf32> -> vector<16x32xf32>
    %c0_39 = arith.constant 0 : index
    %c0_40 = arith.constant 0 : index
    %136 = vector.load %arg4[%c0_39, %c0_40] : memref<1x32xf32, #tpu.memory_space<vmem>>, vector<1x32xf32>
    %137 = vector.shape_cast %136 : vector<1x32xf32> to vector<32xf32>
    %138 = vector.shape_cast %137 : vector<32xf32> to vector<1x32xf32>
    %139 = vector.broadcast %138 : vector<1x32xf32> to vector<16x32xf32>
    %140 = arith.addf %135, %139 : vector<16x32xf32>
    %141 = arith.addf %0, %140 : vector<16x32xf32>
    %c0_41 = arith.constant 0 : index
    %c0_42 = arith.constant 0 : index
    %142 = vector.load %arg11[%c0_41, %c0_42] : memref<1x32xf32, #tpu.memory_space<vmem>>, vector<1x32xf32>
    %143 = vector.shape_cast %142 : vector<1x32xf32> to vector<32xf32>
    %c0_43 = arith.constant 0 : index
    %c0_44 = arith.constant 0 : index
    %144 = vector.load %arg12[%c0_43, %c0_44] : memref<1x32xf32, #tpu.memory_space<vmem>>, vector<1x32xf32>
    %145 = vector.shape_cast %144 : vector<1x32xf32> to vector<32xf32>
    %cst_45 = arith.constant dense<0.000000e+00> : vector<16xf32>
    %146 = vector.multi_reduction <add>, %141, %cst_45 [1] : vector<16x32xf32> to vector<16xf32>
    %147 = vector.shape_cast %146 : vector<16xf32> to vector<16x1xf32>
    %cst_46 = arith.constant 3.200000e+01 : f32
    %148 = vector.broadcast %cst_46 : f32 to vector<16x1xf32>
    %149 = arith.divf %147, %148 : vector<16x1xf32>
    %150 = vector.broadcast %149 : vector<16x1xf32> to vector<16x32xf32>
    %151 = arith.subf %141, %150 : vector<16x32xf32>
    %152 = arith.mulf %151, %151 : vector<16x32xf32>
    %cst_47 = arith.constant dense<0.000000e+00> : vector<16xf32>
    %153 = vector.multi_reduction <add>, %152, %cst_47 [1] : vector<16x32xf32> to vector<16xf32>
    %154 = vector.shape_cast %153 : vector<16xf32> to vector<16x1xf32>
    %cst_48 = arith.constant 3.200000e+01 : f32
    %155 = vector.broadcast %cst_48 : f32 to vector<16x1xf32>
    %156 = arith.divf %154, %155 : vector<16x1xf32>
    %157 = vector.broadcast %149 : vector<16x1xf32> to vector<16x32xf32>
    %158 = arith.subf %141, %157 : vector<16x32xf32>
    %cst_49 = arith.constant 9.99999974E-6 : f32
    %159 = vector.broadcast %cst_49 : f32 to vector<16x1xf32>
    %160 = arith.addf %156, %159 : vector<16x1xf32>
    %161 = math.rsqrt %160 : vector<16x1xf32>
    %162 = vector.broadcast %161 : vector<16x1xf32> to vector<16x32xf32>
    %163 = arith.mulf %158, %162 : vector<16x32xf32>
    %164 = vector.shape_cast %143 : vector<32xf32> to vector<1x32xf32>
    %165 = vector.broadcast %164 : vector<1x32xf32> to vector<16x32xf32>
    %166 = arith.mulf %163, %165 : vector<16x32xf32>
    %167 = vector.shape_cast %145 : vector<32xf32> to vector<1x32xf32>
    %168 = vector.broadcast %167 : vector<1x32xf32> to vector<16x32xf32>
    %169 = arith.addf %166, %168 : vector<16x32xf32>
    %170 = arith.truncf %169 : vector<16x32xf32> to vector<16x32xbf16>
    %c0_50 = arith.constant 0 : index
    %c0_51 = arith.constant 0 : index
    %171 = vector.load %arg5[%c0_50, %c0_51] : memref<32x128xbf16, #tpu.memory_space<vmem>>, vector<32x128xbf16>
    %cst_52 = arith.constant dense<0.000000e+00> : vector<16x128xf32>
    %172 = tpu.matmul %170, %171, %cst_52 {dimension_numbers = #tpu.dot_dimension_numbers<[1], [0], [0], [1], [0, 0, 1, 1], [], []>} : vector<16x32xbf16>, vector<32x128xbf16>, vector<16x128xf32> -> vector<16x128xf32>
    %c0_53 = arith.constant 0 : index
    %c0_54 = arith.constant 0 : index
    %173 = vector.load %arg6[%c0_53, %c0_54] : memref<1x128xf32, #tpu.memory_space<vmem>>, vector<1x128xf32>
    %174 = vector.shape_cast %173 : vector<1x128xf32> to vector<128xf32>
    %175 = vector.shape_cast %174 : vector<128xf32> to vector<1x128xf32>
    %176 = vector.broadcast %175 : vector<1x128xf32> to vector<16x128xf32>
    %177 = arith.addf %172, %176 : vector<16x128xf32>
    %178 = arith.truncf %177 : vector<16x128xf32> to vector<16x128xbf16>
    %cst_55 = arith.constant 5.000000e-01 : bf16
    %179 = vector.broadcast %cst_55 : bf16 to vector<16x128xbf16>
    %180 = arith.mulf %179, %178 : vector<16x128xbf16>
    %181 = arith.mulf %178, %178 : vector<16x128xbf16>
    %182 = arith.mulf %178, %181 : vector<16x128xbf16>
    %cst_56 = arith.constant 4.467770e-02 : bf16
    %183 = vector.broadcast %cst_56 : bf16 to vector<16x128xbf16>
    %184 = arith.mulf %183, %182 : vector<16x128xbf16>
    %185 = arith.addf %178, %184 : vector<16x128xbf16>
    %cst_57 = arith.constant 7.968750e-01 : bf16
    %186 = vector.broadcast %cst_57 : bf16 to vector<16x128xbf16>
    %187 = arith.mulf %186, %185 : vector<16x128xbf16>
    %188 = math.tanh %187 : vector<16x128xbf16>
    %cst_58 = arith.constant 1.000000e+00 : bf16
    %189 = vector.broadcast %cst_58 : bf16 to vector<16x128xbf16>
    %190 = arith.addf %189, %188 : vector<16x128xbf16>
    %191 = arith.mulf %180, %190 : vector<16x128xbf16>
    %c0_59 = arith.constant 0 : index
    %c0_60 = arith.constant 0 : index
    %192 = vector.load %arg7[%c0_59, %c0_60] : memref<128x32xbf16, #tpu.memory_space<vmem>>, vector<128x32xbf16>
    %cst_61 = arith.constant dense<0.000000e+00> : vector<16x32xf32>
    %193 = tpu.matmul %191, %192, %cst_61 {dimension_numbers = #tpu.dot_dimension_numbers<[1], [0], [0], [1], [0, 0, 1, 1], [], []>} : vector<16x128xbf16>, vector<128x32xbf16>, vector<16x32xf32> -> vector<16x32xf32>
    %c0_62 = arith.constant 0 : index
    %c0_63 = arith.constant 0 : index
    %194 = vector.load %arg8[%c0_62, %c0_63] : memref<1x32xf32, #tpu.memory_space<vmem>>, vector<1x32xf32>
    %195 = vector.shape_cast %194 : vector<1x32xf32> to vector<32xf32>
    %196 = vector.shape_cast %195 : vector<32xf32> to vector<1x32xf32>
    %197 = vector.broadcast %196 : vector<1x32xf32> to vector<16x32xf32>
    %198 = arith.addf %193, %197 : vector<16x32xf32>
    %199 = arith.addf %141, %198 : vector<16x32xf32>
    %c0_64 = arith.constant 0 : index
    %c0_65 = arith.constant 0 : index
    %200 = vector.load %arg13[%c0_64, %c0_65] : memref<16x32xf32, #tpu.memory_space<vmem>>, vector<16x32xf32>
    tpu.vector_store %arg13[%c0_64, %c0_65], %199 {strides = array<i32>} : memref<16x32xf32, #tpu.memory_space<vmem>>, vector<16x32xf32>,
    return
  }
  func.func @transform_0(%arg0: i32) -> (i32, i32) {
    %c0_i32 = arith.constant 0 : i32
    %c0_i32_0 = arith.constant 0 : i32
    return %arg0, %c0_i32 : i32, i32
  }
  func.func @transform_1(%arg0: i32) -> (i32, i32) {
    %c0_i32 = arith.constant 0 : i32
    %c0_i32_0 = arith.constant 0 : i32
    %c0_i32_1 = arith.constant 0 : i32
    return %c0_i32, %c0_i32_0 : i32, i32
  }
  func.func @transform_2(%arg0: i32) -> (i32, i32) {
    %c0_i32 = arith.constant 0 : i32
    %c0_i32_0 = arith.constant 0 : i32
    %c0_i32_1 = arith.constant 0 : i32
    return %c0_i32, %c0_i32_0 : i32, i32
  }
  func.func @transform_3(%arg0: i32) -> (i32, i32) {
    %c0_i32 = arith.constant 0 : i32
    %c0_i32_0 = arith.constant 0 : i32
    %c0_i32_1 = arith.constant 0 : i32
    return %c0_i32, %c0_i32_0 : i32, i32
  }
  func.func @transform_4(%arg0: i32) -> (i32, i32) {
    %c0_i32 = arith.constant 0 : i32
    %c0_i32_0 = arith.constant 0 : i32
    %c0_i32_1 = arith.constant 0 : i32
    return %c0_i32, %c0_i32_0 : i32, i32
  }
  func.func @transform_5(%arg0: i32) -> (i32, i32) {
    %c0_i32 = arith.constant 0 : i32
    %c0_i32_0 = arith.constant 0 : i32
    %c0_i32_1 = arith.constant 0 : i32
    return %c0_i32, %c0_i32_0 : i32, i32
  }
  func.func @transform_6(%arg0: i32) -> (i32, i32) {
    %c0_i32 = arith.constant 0 : i32
    %c0_i32_0 = arith.constant 0 : i32
    %c0_i32_1 = arith.constant 0 : i32
    return %c0_i32, %c0_i32_0 : i32, i32
  }
  func.func @transform_7(%arg0: i32) -> (i32, i32) {
    %c0_i32 = arith.constant 0 : i32
    %c0_i32_0 = arith.constant 0 : i32
    %c0_i32_1 = arith.constant 0 : i32
    return %c0_i32, %c0_i32_0 : i32, i32
  }
  func.func @transform_8(%arg0: i32) -> (i32, i32) {
    %c0_i32 = arith.constant 0 : i32
    %c0_i32_0 = arith.constant 0 : i32
    %c0_i32_1 = arith.constant 0 : i32
    return %c0_i32, %c0_i32_0 : i32, i32
  }
  func.func @transform_9(%arg0: i32) -> (i32, i32) {
    %c0_i32 = arith.constant 0 : i32
    %c0_i32_0 = arith.constant 0 : i32
    %c0_i32_1 = arith.constant 0 : i32
    return %c0_i32, %c0_i32_0 : i32, i32
  }
  func.func @transform_10(%arg0: i32) -> (i32, i32) {
    %c0_i32 = arith.constant 0 : i32
    %c0_i32_0 = arith.constant 0 : i32
    %c0_i32_1 = arith.constant 0 : i32
    return %c0_i32, %c0_i32_0 : i32, i32
  }
  func.func @transform_11(%arg0: i32) -> (i32, i32) {
    %c0_i32 = arith.constant 0 : i32
    %c0_i32_0 = arith.constant 0 : i32
    %c0_i32_1 = arith.constant 0 : i32
    return %c0_i32, %c0_i32_0 : i32, i32
  }
  func.func @transform_12(%arg0: i32) -> (i32, i32) {
    %c0_i32 = arith.constant 0 : i32
    %c0_i32_0 = arith.constant 0 : i32
    return %arg0, %c0_i32 : i32, i32
  }
}

</mosaic_0001>

<llo_original>
// kernel: tpu_custom_call.1
$region0: #{tpu_custom_call.1}
  #allocation0 [shape = 'u32[]', space=smem, size = 0x4, offset = 0x4, fixed_abs, tag = 'smem constant byte address 0x4 - core index']
  #allocation1 [shape = 'u32[72,128]{1,0:T(1,128)}', space=vmem, size = 0x9000, scoped, tag = 'internal scratch']
  %s0 = inlined_call_operand.vmem [shape: f32[16,32], index: 0, kind: input, shape index: {}]
  %s1 = inlined_call_operand.vmem [shape: bf16[32,96], index: 1, kind: input, shape index: {}]
  %s2 = inlined_call_operand.vmem [shape: bf16[32,32], index: 2, kind: input, shape index: {}]
  %s3 = inlined_call_operand.vmem [shape: f32[1,32], index: 3, kind: input, shape index: {}]
  %s4 = inlined_call_operand.vmem [shape: bf16[32,128], index: 4, kind: input, shape index: {}]
  %s5 = inlined_call_operand.vmem [shape: f32[1,128], index: 5, kind: input, shape index: {}]
  %s6 = inlined_call_operand.vmem [shape: bf16[128,32], index: 6, kind: input, shape index: {}]
  %s7 = inlined_call_operand.vmem [shape: f32[1,32], index: 7, kind: input, shape index: {}]
  %s8 = inlined_call_operand.vmem [shape: f32[1,32], index: 8, kind: input, shape index: {}]
  %s9 = inlined_call_operand.vmem [shape: f32[1,32], index: 9, kind: input, shape index: {}]
  %s10 = inlined_call_operand.vmem [shape: f32[1,32], index: 10, kind: input, shape index: {}]
  %s11 = inlined_call_operand.vmem [shape: f32[1,32], index: 11, kind: input, shape index: {}]
  %s12 = inlined_call_operand.hbm [shape: f32[16,32], index: 12, kind: output, shape index: {}]
  %s13 = sld [smem:[#allocation0]]
  $region58: #{tpu_custom_call.1} parent=0
    _
  %s15 = ssub.s32 1, %s13
  %s16 = scalar_select 0, %s15, %s13
  $region1: #{tpu_custom_call.1} parent=0
    #allocation2 [shape = 'u8[8192]{0}', space=vmem, size = 0x2000, scoped, tag = 'output window, operand 0, single buffered']
    #allocation3 [shape = 's32[1]{0}', space=sflag, size = 0x4, scoped, tag = 'scoped memory for tpu_custom_call.1']
    %17 = vsyncpa [#allocation3], 0
    // Predicated region
    $region2: #{tpu_custom_call.1} parent=1 // pred_check
      _
    $region3: #{tpu_custom_call.1} parent=1 // pred_check_branch
      %19 = sbr.rel (0) target = $region5
    $region4: #{tpu_custom_call.1} parent=1 // pred_region
      _
    $region5: #{tpu_custom_call.1} parent=1 // pred_fallthru
      _
    // Predicated region
    $region6: #{tpu_custom_call.1} parent=1 // pred_check
      _
    $region7: #{tpu_custom_call.1} parent=1 // pred_check_branch
      %21 = sbr.rel (0) target = $region9
    $region8: #{tpu_custom_call.1} parent=1 // pred_region
      _
    $region9: #{tpu_custom_call.1} parent=1 // pred_fallthru
      _
    // Predicated region
    $region10: #{tpu_custom_call.1} parent=1 // pred_check
      _
    $region11: #{tpu_custom_call.1} parent=1 // pred_check_branch
      %23 = sbr.rel (0) target = $region13
    $region12: #{tpu_custom_call.1} parent=1 // pred_region
      _
    $region13: #{tpu_custom_call.1} parent=1 // pred_fallthru
      _
    // Predicated region
    $region14: #{tpu_custom_call.1} parent=1 // pred_check
      _
    $region15: #{tpu_custom_call.1} parent=1 // pred_check_branch
      %25 = sbr.rel (0) target = $region17
    $region16: #{tpu_custom_call.1} parent=1 // pred_region
      _
    $region17: #{tpu_custom_call.1} parent=1 // pred_fallthru
      _
    // Predicated region
    $region18: #{tpu_custom_call.1} parent=1 // pred_check
      _
    $region19: #{tpu_custom_call.1} parent=1 // pred_check_branch
      %27 = sbr.rel (0) target = $region21
    $region20: #{tpu_custom_call.1} parent=1 // pred_region
      _
    $region21: #{tpu_custom_call.1} parent=1 // pred_fallthru
      _
    // Predicated region
    $region22: #{tpu_custom_call.1} parent=1 // pred_check
      _
    $region23: #{tpu_custom_call.1} parent=1 // pred_check_branch
      %29 = sbr.rel (0) target = $region25
    $region24: #{tpu_custom_call.1} parent=1 // pred_region
      _
    $region25: #{tpu_custom_call.1} parent=1 // pred_fallthru
      _
    // Predicated region
    $region26: #{tpu_custom_call.1} parent=1 // pred_check
      _
    $region27: #{tpu_custom_call.1} parent=1 // pred_check_branch
      %31 = sbr.rel (0) target = $region29
    $region28: #{tpu_custom_call.1} parent=1 // pred_region
      _
    $region29: #{tpu_custom_call.1} parent=1 // pred_fallthru
      _
    // Predicated region
    $region30: #{tpu_custom_call.1} parent=1 // pred_check
      _
    $region31: #{tpu_custom_call.1} parent=1 // pred_check_branch
      %33 = sbr.rel (0) target = $region33
    $region32: #{tpu_custom_call.1} parent=1 // pred_region
      _
    $region33: #{tpu_custom_call.1} parent=1 // pred_fallthru
      _
    // Predicated region
    $region34: #{tpu_custom_call.1} parent=1 // pred_check
      _
    $region35: #{tpu_custom_call.1} parent=1 // pred_check_branch
      %35 = sbr.rel (0) target = $region37
    $region36: #{tpu_custom_call.1} parent=1 // pred_region
      _
    $region37: #{tpu_custom_call.1} parent=1 // pred_fallthru
      _
    // Predicated region
    $region38: #{tpu_custom_call.1} parent=1 // pred_check
      _
    $region39: #{tpu_custom_call.1} parent=1 // pred_check_branch
      %37 = sbr.rel (0) target = $region41
    $region40: #{tpu_custom_call.1} parent=1 // pred_region
      _
    $region41: #{tpu_custom_call.1} parent=1 // pred_fallthru
      _
    // Predicated region
    $region42: #{tpu_custom_call.1} parent=1 // pred_check
      _
    $region43: #{tpu_custom_call.1} parent=1 // pred_check_branch
      %39 = sbr.rel (0) target = $region45
    $region44: #{tpu_custom_call.1} parent=1 // pred_region
      _
    $region45: #{tpu_custom_call.1} parent=1 // pred_fallthru
      _
    // Predicated region
    $region46: #{tpu_custom_call.1} parent=1 // pred_check
      _
    $region47: #{tpu_custom_call.1} parent=1 // pred_check_branch
      %41 = sbr.rel (0) target = $region49
    $region48: #{tpu_custom_call.1} parent=1 // pred_region
      _
    $region49: #{tpu_custom_call.1} parent=1 // pred_fallthru
      _
    %v43 = vld [vmem:[%s0] sm:$0xff]
    %v44 = vld [vmem:[%s0 + $0x8] sm:$0xff]
    %v45 = vld [vmem:[%s8] sm:$0x1]
    %v46 = vld [vmem:[%s9] sm:$0x1]
    %vm47 = vcmask 261120
    %v48 = vsel %vm47, %v43, 0.0
    %49 = vadd.xlane.f32.xlu0 %v48
    %v50 = vpop.xlane.xlu0 %49
    %v51 = vsel %vm47, %v44, 0.0
    %52 = vadd.xlane.f32.xlu0 %v51
    %v53 = vpop.xlane.xlu0 %52
    %v54 = vrcp.pop 32.0
    %v55 = vmul.f32 32.0, %v54
    %v56 = vsub.f32 1.0, %v55
    %v57 = vmul.f32 %v54, %v56
    %v58 = vadd.f32 %v54, %v57
    %vm59 = vweird.f32 %v54
    %v60 = vsel %vm59, %v54, %v58
    %v61 = vmul.f32 %v50, %v60
    %v62 = vmul.f32 %v53, %v60
    %v63 = vsub.f32 %v43, %v61
    %v64 = vsub.f32 %v44, %v62
    %v65 = vmul.f32 %v63, %v63
    %v66 = vmul.f32 %v64, %v64
    %v67 = vsel %vm47, %v65, 0.0
    %68 = vadd.xlane.f32.xlu0 %v67
    %v69 = vpop.xlane.xlu0 %68
    %v70 = vsel %vm47, %v66, 0.0
    %71 = vadd.xlane.f32.xlu0 %v70
    %v72 = vpop.xlane.xlu0 %71
    %v73 = vmul.f32 %v69, %v60
    %v74 = vmul.f32 %v72, %v60
    %v75 = vadd.f32 %v73, 1e-05
    %v76 = vadd.f32 %v74, 1e-05
    %v77 = vrsqrt.pop %v75
    %v78 = vmul.f32 %v77, %v75
    %v79 = vmul.f32 %v78, %v77
    %v80 = vmul.f32 0.5, %v79
    %v81 = vsub.f32 1.5, %v80
    %v82 = vmul.f32 %v77, %v81
    %vm83 = vweird.f32 %v75
    %vm84 = vweird.f32 %v77
    %vm85 = vmor %vm83, %vm84
    %v86 = vsel %vm85, %v77, %v82
    %v87 = vrsqrt.pop %v76
    %v88 = vmul.f32 %v87, %v76
    %v89 = vmul.f32 %v88, %v87
    %v90 = vmul.f32 0.5, %v89
    %v91 = vsub.f32 1.5, %v90
    %v92 = vmul.f32 %v87, %v91
    %vm93 = vweird.f32 %v76
    %vm94 = vweird.f32 %v87
    %vm95 = vmor %vm93, %vm94
    %v96 = vsel %vm95, %v87, %v92
    %v97 = vmul.f32 %v63, %v86
    %v98 = vmul.f32 %v64, %v96
    %v100 = vperm.slane %v45, 0
    %v102 = vmul.f32 %v97, %v100
    %v103 = vmul.f32 %v98, %v100
    %v105 = vperm.slane %v46, 0
    %v107 = vadd.f32 %v102, %v105
    %v108 = vadd.f32 %v103, %v105
    %v109 = vpack.c.bf16 %v108, %v107
    %v110 = vld [vmem:[%s1] sm:$0xf]
    %v111 = vld [vmem:[%s1 + $0x4] sm:$0xf]
    %v112 = vld [vmem:[%s1 + $0x8] sm:$0xf]
    %v113 = vld [vmem:[%s1 + $0xc] sm:$0xf]
    %v118 = vunpack.c.l.b16 %v110
    %v119 = vunpack.c.l.b16 %v111
    %v120 = vunpack.c.l.b16 %v112
    %v121 = vunpack.c.l.b16 %v113
    %v122 = vpack.c.b16 %v119, %v118
    %v123 = vpack.c.b16 %v121, %v120
    %v127 = vsel %vm47, %v109, 0
    %129 = vmatpush.bf16.msra.mxu0 0
    %130 = vmatpush.bf16.msra.mxu0 0
    %131 = vmatpush.bf16.msra.mxu0 0
    %132 = vmatpush.bf16.msra.mxu0 0
    %133 = vmatpush.bf16.msra.mxu0 0
    %134 = vmatpush.bf16.msra.mxu0 0
    %135 = vmatpush.bf16.msra.mxu0 %v123
    %136 = vmatpush.bf16.msra.mxu0 %v122
    %137 = vmatmul.bf16.gmra.mxu0 %v127
    %v138 = vpop.f32.mrf.mxu0
    %v139 = vadd.f32 0.0, %v138
    %v140 = vpop.f32.mrf.mxu0
    %v141 = vadd.f32 0.0, %v140
    %142 = vdwg.mxu0
    %v143 = vpack.c.bf16 %v139, %v139
    %v144 = vpack.c.bf16 %v141, %v141
    %v145 = vlaneseq
    %v146 = vshrl.u32 %v145, 7
    %v147 = vlaneseq
    %v148 = vand.u32 %v147, 127
    %vm149 = vcmp.le.s32.totalorder %v148, %v146
    %v151 = vunpack.c.l.b16 %v143
    %v152 = vpack.c.b16 %v151, %v151
    %153 = vrot.lane.b32.xlu0 %v152, 96
    %v154 = vpop.permute.xlu0 %153
    %vm155 = vcmask 64512
    %v157 = vsel %vm155, %v143, 0
    %v160 = vsel %vm155, %v154, 0
    %162 = vmatpush.bf16.xpose.msra.mxu0 0
    %163 = vmatpush.bf16.xpose.msra.mxu0 0
    %164 = vmatpush.bf16.xpose.msra.mxu0 0
    %165 = vmatpush.bf16.xpose.msra.mxu0 0
    %166 = vmatpush.bf16.xpose.msra.mxu0 0
    %167 = vmatpush.bf16.xpose.msra.mxu0 0
    %168 = vmatpush.bf16.xpose.msra.mxu0 0
    %169 = vmatpush.bf16.xpose.msra.mxu0 %v160
    %170 = vmatmul.bf16.gmra.mxu0 %v157
    %v171 = vpop.f32.mrf.mxu0
    %v172 = vadd.f32 0.0, %v171
    %v173 = vpop.f32.mrf.mxu0
    %174 = vdwg.mxu0
    %v176 = vunpack.c.l.b16 %v144
    %v177 = vpack.c.b16 %v176, %v176
    %178 = vrot.lane.b32.xlu0 %v177, 96
    %v179 = vpop.permute.xlu0 %178
    %v181 = vsel %vm155, %v144, 0
    %v184 = vsel %vm155, %v179, 0
    %186 = vmatpush.bf16.xpose.msra.mxu0 0
    %187 = vmatpush.bf16.xpose.msra.mxu0 0
    %188 = vmatpush.bf16.xpose.msra.mxu0 0
    %189 = vmatpush.bf16.xpose.msra.mxu0 0
    %190 = vmatpush.bf16.xpose.msra.mxu0 0
    %191 = vmatpush.bf16.xpose.msra.mxu0 0
    %192 = vmatpush.bf16.xpose.msra.mxu0 0
    %193 = vmatpush.bf16.xpose.msra.mxu0 %v184
    %194 = vmatmul.bf16.gmra.mxu0 %v181
    %v195 = vpop.f32.mrf.mxu0
    %v196 = vadd.f32 0.0, %v195
    %v197 = vpop.f32.mrf.mxu0
    %198 = vdwg.mxu0
    %v199 = vmul.f32 %v172, 0.35355338
    %v200 = vmul.f32 %v196, 0.35355338
    %v201 = vsel %vm149, %v199, -1e+30
    %v202 = vsel %vm149, %v200, -1e+30
    %v203 = vsel %vm155, %v201, -inf
    %204 = vmax.xlane.f32.xlu0 %v203
    %v205 = vpop.xlane.xlu0 %204
    %v206 = vsel %vm155, %v202, -inf
    %207 = vmax.xlane.f32.xlu0 %v206
    %v208 = vpop.xlane.xlu0 %207
    %v209 = vsub.f32 %v201, %v205
    %v210 = vsub.f32 %v202, %v208
    %v211 = vmul.f32 %v209, 1.442695
    %v212 = vpow.pop %v211
    %v213 = vmul.f32 %v210, 1.442695
    %v214 = vpow.pop %v213
    %v215 = vsel %vm155, %v212, 0.0
    %216 = vadd.xlane.f32.xlu0 %v215
    %v217 = vpop.xlane.xlu0 %216
    %v218 = vsel %vm155, %v214, 0.0
    %219 = vadd.xlane.f32.xlu0 %v218
    %v220 = vpop.xlane.xlu0 %219
    %v221 = vrcp.pop %v217
    %v222 = vrcp.pop %v220
    %v223 = vmul.f32 %v212, %v221
    %v224 = vmul.f32 %v214, %v222
    %v225 = vpack.c.bf16 %v223, %v223
    %v226 = vpack.c.bf16 %v224, %v224
    %227 = vrot.lane.b32.xlu0 %v152, 64
    %v228 = vpop.permute.xlu0 %227
    %v230 = vsel %vm155, %v225, 0
    %vm232 = vcmask 1043456
    %v234 = vsel %vm232, %v228, 0
    %236 = vmatpush.bf16.msra.mxu0 0
    %237 = vmatpush.bf16.msra.mxu0 0
    %238 = vmatpush.bf16.msra.mxu0 0
    %239 = vmatpush.bf16.msra.mxu0 0
    %240 = vmatpush.bf16.msra.mxu0 0
    %241 = vmatpush.bf16.msra.mxu0 0
    %242 = vmatpush.bf16.msra.mxu0 0
    %243 = vmatpush.bf16.msra.mxu0 %v234
    %244 = vmatmul.bf16.gmra.mxu0 %v230
    %v245 = vpop.f32.mrf.mxu0
    %v246 = vadd.f32 0.0, %v245
    %v247 = vpop.f32.mrf.mxu0
    %248 = vdwg.mxu0
    %249 = vrot.lane.b32.xlu0 %v177, 64
    %v250 = vpop.permute.xlu0 %249
    %v252 = vsel %vm155, %v226, 0
    %v255 = vsel %vm232, %v250, 0
    %257 = vmatpush.bf16.msra.mxu0 0
    %258 = vmatpush.bf16.msra.mxu0 0
    %259 = vmatpush.bf16.msra.mxu0 0
    %260 = vmatpush.bf16.msra.mxu0 0
    %261 = vmatpush.bf16.msra.mxu0 0
    %262 = vmatpush.bf16.msra.mxu0 0
    %263 = vmatpush.bf16.msra.mxu0 0
    %264 = vmatpush.bf16.msra.mxu0 %v255
    %265 = vmatmul.bf16.gmra.mxu0 %v252
    %v266 = vpop.f32.mrf.mxu0
    %v267 = vadd.f32 0.0, %v266
    %v268 = vpop.f32.mrf.mxu0
    %269 = vdwg.mxu0
    %270 = vrot.lane.b32.xlu0 %v152, 120
    %v271 = vpop.permute.xlu0 %270
    %272 = vrot.lane.b32.xlu0 %v152, 88
    %v273 = vpop.permute.xlu0 %272
    %v275 = vsel %vm155, %v271, 0
    %v278 = vsel %vm155, %v273, 0
    %280 = vmatpush.bf16.xpose.msra.mxu0 0
    %281 = vmatpush.bf16.xpose.msra.mxu0 0
    %282 = vmatpush.bf16.xpose.msra.mxu0 0
    %283 = vmatpush.bf16.xpose.msra.mxu0 0
    %284 = vmatpush.bf16.xpose.msra.mxu0 0
    %285 = vmatpush.bf16.xpose.msra.mxu0 0
    %286 = vmatpush.bf16.xpose.msra.mxu0 0
    %287 = vmatpush.bf16.xpose.msra.mxu0 %v278
    %288 = vmatmul.bf16.gmra.mxu0 %v275
    %v289 = vpop.f32.mrf.mxu0
    %v290 = vadd.f32 0.0, %v289
    %v291 = vpop.f32.mrf.mxu0
    %292 = vdwg.mxu0
    %293 = vrot.lane.b32.xlu0 %v177, 120
    %v294 = vpop.permute.xlu0 %293
    %295 = vrot.lane.b32.xlu0 %v177, 88
    %v296 = vpop.permute.xlu0 %295
    %v298 = vsel %vm155, %v294, 0
    %v301 = vsel %vm155, %v296, 0
    %303 = vmatpush.bf16.xpose.msra.mxu0 0
    %304 = vmatpush.bf16.xpose.msra.mxu0 0
    %305 = vmatpush.bf16.xpose.msra.mxu0 0
    %306 = vmatpush.bf16.xpose.msra.mxu0 0
    %307 = vmatpush.bf16.xpose.msra.mxu0 0
    %308 = vmatpush.bf16.xpose.msra.mxu0 0
    %309 = vmatpush.bf16.xpose.msra.mxu0 0
    %310 = vmatpush.bf16.xpose.msra.mxu0 %v301
    %311 = vmatmul.bf16.gmra.mxu0 %v298
    %v312 = vpop.f32.mrf.mxu0
    %v313 = vadd.f32 0.0, %v312
    %v314 = vpop.f32.mrf.mxu0
    %315 = vdwg.mxu0
    %v316 = vmul.f32 %v290, 0.35355338
    %v317 = vmul.f32 %v313, 0.35355338
    %v318 = vsel %vm149, %v316, -1e+30
    %v319 = vsel %vm149, %v317, -1e+30
    %v320 = vsel %vm155, %v318, -inf
    %321 = vmax.xlane.f32.xlu0 %v320
    %v322 = vpop.xlane.xlu0 %321
    %v323 = vsel %vm155, %v319, -inf
    %324 = vmax.xlane.f32.xlu0 %v323
    %v325 = vpop.xlane.xlu0 %324
    %v326 = vsub.f32 %v318, %v322
    %v327 = vsub.f32 %v319, %v325
    %v328 = vmul.f32 %v326, 1.442695
    %v329 = vpow.pop %v328
    %v330 = vmul.f32 %v327, 1.442695
    %v331 = vpow.pop %v330
    %v332 = vsel %vm155, %v329, 0.0
    %333 = vadd.xlane.f32.xlu0 %v332
    %v334 = vpop.xlane.xlu0 %333
    %v335 = vsel %vm155, %v331, 0.0
    %336 = vadd.xlane.f32.xlu0 %v335
    %v337 = vpop.xlane.xlu0 %336
    %v338 = vrcp.pop %v334
    %v339 = vrcp.pop %v337
    %v340 = vmul.f32 %v329, %v338
    %v341 = vmul.f32 %v331, %v339
    %v342 = vpack.c.bf16 %v340, %v340
    %v343 = vpack.c.bf16 %v341, %v341
    %344 = vrot.lane.b32.xlu0 %v152, 56
    %v345 = vpop.permute.xlu0 %344
    %v347 = vsel %vm155, %v342, 0
    %v350 = vsel %vm232, %v345, 0
    %352 = vmatpush.bf16.msra.mxu0 0
    %353 = vmatpush.bf16.msra.mxu0 0
    %354 = vmatpush.bf16.msra.mxu0 0
    %355 = vmatpush.bf16.msra.mxu0 0
    %356 = vmatpush.bf16.msra.mxu0 0
    %357 = vmatpush.bf16.msra.mxu0 0
    %358 = vmatpush.bf16.msra.mxu0 0
    %359 = vmatpush.bf16.msra.mxu0 %v350
    %360 = vmatmul.bf16.gmra.mxu0 %v347
    %v361 = vpop.f32.mrf.mxu0
    %v362 = vadd.f32 0.0, %v361
    %v363 = vpop.f32.mrf.mxu0
    %364 = vdwg.mxu0
    %365 = vrot.lane.b32.xlu0 %v177, 56
    %v366 = vpop.permute.xlu0 %365
    %v368 = vsel %vm155, %v343, 0
    %v371 = vsel %vm232, %v366, 0
    %373 = vmatpush.bf16.msra.mxu0 0
    %374 = vmatpush.bf16.msra.mxu0 0
    %375 = vmatpush.bf16.msra.mxu0 0
    %376 = vmatpush.bf16.msra.mxu0 0
    %377 = vmatpush.bf16.msra.mxu0 0
    %378 = vmatpush.bf16.msra.mxu0 0
    %379 = vmatpush.bf16.msra.mxu0 0
    %380 = vmatpush.bf16.msra.mxu0 %v371
    %381 = vmatmul.bf16.gmra.mxu0 %v368
    %v382 = vpop.f32.mrf.mxu0
    %v383 = vadd.f32 0.0, %v382
    %v384 = vpop.f32.mrf.mxu0
    %385 = vdwg.mxu0
    %386 = vrot.lane.b32.xlu0 %v152, 112
    %v387 = vpop.permute.xlu0 %386
    %388 = vrot.lane.b32.xlu0 %v152, 80
    %v389 = vpop.permute.xlu0 %388
    %v391 = vsel %vm155, %v387, 0
    %v394 = vsel %vm155, %v389, 0
    %396 = vmatpush.bf16.xpose.msra.mxu0 0
    %397 = vmatpush.bf16.xpose.msra.mxu0 0
    %398 = vmatpush.bf16.xpose.msra.mxu0 0
    %399 = vmatpush.bf16.xpose.msra.mxu0 0
    %400 = vmatpush.bf16.xpose.msra.mxu0 0
    %401 = vmatpush.bf16.xpose.msra.mxu0 0
    %402 = vmatpush.bf16.xpose.msra.mxu0 0
    %403 = vmatpush.bf16.xpose.msra.mxu0 %v394
    %404 = vmatmul.bf16.gmra.mxu0 %v391
    %v405 = vpop.f32.mrf.mxu0
    %v406 = vadd.f32 0.0, %v405
    %v407 = vpop.f32.mrf.mxu0
    %408 = vdwg.mxu0
    %409 = vrot.lane.b32.xlu0 %v177, 112
    %v410 = vpop.permute.xlu0 %409
    %411 = vrot.lane.b32.xlu0 %v177, 80
    %v412 = vpop.permute.xlu0 %411
    %v414 = vsel %vm155, %v410, 0
    %v417 = vsel %vm155, %v412, 0
    %419 = vmatpush.bf16.xpose.msra.mxu0 0
    %420 = vmatpush.bf16.xpose.msra.mxu0 0
    %421 = vmatpush.bf16.xpose.msra.mxu0 0
    %422 = vmatpush.bf16.xpose.msra.mxu0 0
    %423 = vmatpush.bf16.xpose.msra.mxu0 0
    %424 = vmatpush.bf16.xpose.msra.mxu0 0
    %425 = vmatpush.bf16.xpose.msra.mxu0 0
    %426 = vmatpush.bf16.xpose.msra.mxu0 %v417
    %427 = vmatmul.bf16.gmra.mxu0 %v414
    %v428 = vpop.f32.mrf.mxu0
    %v429 = vadd.f32 0.0, %v428
    %v430 = vpop.f32.mrf.mxu0
    %431 = vdwg.mxu0
    %v432 = vmul.f32 %v406, 0.35355338
    %v433 = vmul.f32 %v429, 0.35355338
    %v434 = vsel %vm149, %v432, -1e+30
    %v435 = vsel %vm149, %v433, -1e+30
    %v436 = vsel %vm155, %v434, -inf
    %437 = vmax.xlane.f32.xlu0 %v436
    %v438 = vpop.xlane.xlu0 %437
    %v439 = vsel %vm155, %v435, -inf
    %440 = vmax.xlane.f32.xlu0 %v439
    %v441 = vpop.xlane.xlu0 %440
    %v442 = vsub.f32 %v434, %v438
    %v443 = vsub.f32 %v435, %v441
    %v444 = vmul.f32 %v442, 1.442695
    %v445 = vpow.pop %v444
    %v446 = vmul.f32 %v443, 1.442695
    %v447 = vpow.pop %v446
    %v448 = vsel %vm155, %v445, 0.0
    %449 = vadd.xlane.f32.xlu0 %v448
    %v450 = vpop.xlane.xlu0 %449
    %v451 = vsel %vm155, %v447, 0.0
    %452 = vadd.xlane.f32.xlu0 %v451
    %v453 = vpop.xlane.xlu0 %452
    %v454 = vrcp.pop %v450
    %v455 = vrcp.pop %v453
    %v456 = vmul.f32 %v445, %v454
    %v457 = vmul.f32 %v447, %v455
    %v458 = vpack.c.bf16 %v456, %v456
    %v459 = vpack.c.bf16 %v457, %v457
    %460 = vrot.lane.b32.xlu0 %v152, 48
    %v461 = vpop.permute.xlu0 %460
    %v463 = vsel %vm155, %v458, 0
    %v466 = vsel %vm232, %v461, 0
    %468 = vmatpush.bf16.msra.mxu0 0
    %469 = vmatpush.bf16.msra.mxu0 0
    %470 = vmatpush.bf16.msra.mxu0 0
    %471 = vmatpush.bf16.msra.mxu0 0
    %472 = vmatpush.bf16.msra.mxu0 0
    %473 = vmatpush.bf16.msra.mxu0 0
    %474 = vmatpush.bf16.msra.mxu0 0
    %475 = vmatpush.bf16.msra.mxu0 %v466
    %476 = vmatmul.bf16.gmra.mxu0 %v463
    %v477 = vpop.f32.mrf.mxu0
    %v478 = vadd.f32 0.0, %v477
    %v479 = vpop.f32.mrf.mxu0
    %480 = vdwg.mxu0
    %481 = vrot.lane.b32.xlu0 %v177, 48
    %v482 = vpop.permute.xlu0 %481
    %v484 = vsel %vm155, %v459, 0
    %v487 = vsel %vm232, %v482, 0
    %489 = vmatpush.bf16.msra.mxu0 0
    %490 = vmatpush.bf16.msra.mxu0 0
    %491 = vmatpush.bf16.msra.mxu0 0
    %492 = vmatpush.bf16.msra.mxu0 0
    %493 = vmatpush.bf16.msra.mxu0 0
    %494 = vmatpush.bf16.msra.mxu0 0
    %495 = vmatpush.bf16.msra.mxu0 0
    %496 = vmatpush.bf16.msra.mxu0 %v487
    %497 = vmatmul.bf16.gmra.mxu0 %v484
    %v498 = vpop.f32.mrf.mxu0
    %v499 = vadd.f32 0.0, %v498
    %v500 = vpop.f32.mrf.mxu0
    %501 = vdwg.mxu0
    %502 = vrot.lane.b32.xlu0 %v152, 104
    %v503 = vpop.permute.xlu0 %502
    %504 = vrot.lane.b32.xlu0 %v152, 72
    %v505 = vpop.permute.xlu0 %504
    %v507 = vsel %vm155, %v503, 0
    %v510 = vsel %vm155, %v505, 0
    %512 = vmatpush.bf16.xpose.msra.mxu0 0
    %513 = vmatpush.bf16.xpose.msra.mxu0 0
    %514 = vmatpush.bf16.xpose.msra.mxu0 0
    %515 = vmatpush.bf16.xpose.msra.mxu0 0
    %516 = vmatpush.bf16.xpose.msra.mxu0 0
    %517 = vmatpush.bf16.xpose.msra.mxu0 0
    %518 = vmatpush.bf16.xpose.msra.mxu0 0
    %519 = vmatpush.bf16.xpose.msra.mxu0 %v510
    %520 = vmatmul.bf16.gmra.mxu0 %v507
    %v521 = vpop.f32.mrf.mxu0
    %v522 = vadd.f32 0.0, %v521
    %v523 = vpop.f32.mrf.mxu0
    %524 = vdwg.mxu0
    %525 = vrot.lane.b32.xlu0 %v177, 104
    %v526 = vpop.permute.xlu0 %525
    %527 = vrot.lane.b32.xlu0 %v177, 72
    %v528 = vpop.permute.xlu0 %527
    %v530 = vsel %vm155, %v526, 0
    %v533 = vsel %vm155, %v528, 0
    %535 = vmatpush.bf16.xpose.msra.mxu0 0
    %536 = vmatpush.bf16.xpose.msra.mxu0 0
    %537 = vmatpush.bf16.xpose.msra.mxu0 0
    %538 = vmatpush.bf16.xpose.msra.mxu0 0
    %539 = vmatpush.bf16.xpose.msra.mxu0 0
    %540 = vmatpush.bf16.xpose.msra.mxu0 0
    %541 = vmatpush.bf16.xpose.msra.mxu0 0
    %542 = vmatpush.bf16.xpose.msra.mxu0 %v533
    %543 = vmatmul.bf16.gmra.mxu0 %v530
    %v544 = vpop.f32.mrf.mxu0
    %v545 = vadd.f32 0.0, %v544
    %v546 = vpop.f32.mrf.mxu0
    %547 = vdwg.mxu0
    %v548 = vmul.f32 %v522, 0.35355338
    %v549 = vmul.f32 %v545, 0.35355338
    %v550 = vsel %vm149, %v548, -1e+30
    %v551 = vsel %vm149, %v549, -1e+30
    %v552 = vsel %vm155, %v550, -inf
    %553 = vmax.xlane.f32.xlu0 %v552
    %v554 = vpop.xlane.xlu0 %553
    %v555 = vsel %vm155, %v551, -inf
    %556 = vmax.xlane.f32.xlu0 %v555
    %v557 = vpop.xlane.xlu0 %556
    %v558 = vsub.f32 %v550, %v554
    %v559 = vsub.f32 %v551, %v557
    %v560 = vmul.f32 %v558, 1.442695
    %v561 = vpow.pop %v560
    %v562 = vmul.f32 %v559, 1.442695
    %v563 = vpow.pop %v562
    %v564 = vsel %vm155, %v561, 0.0
    %565 = vadd.xlane.f32.xlu0 %v564
    %v566 = vpop.xlane.xlu0 %565
    %v567 = vsel %vm155, %v563, 0.0
    %568 = vadd.xlane.f32.xlu0 %v567
    %v569 = vpop.xlane.xlu0 %568
    %v570 = vrcp.pop %v566
    %v571 = vrcp.pop %v569
    %v572 = vmul.f32 %v561, %v570
    %v573 = vmul.f32 %v563, %v571
    %v574 = vpack.c.bf16 %v572, %v572
    %v575 = vpack.c.bf16 %v573, %v573
    %576 = vrot.lane.b32.xlu0 %v152, 40
    %v577 = vpop.permute.xlu0 %576
    %v579 = vsel %vm155, %v574, 0
    %v582 = vsel %vm232, %v577, 0
    %584 = vmatpush.bf16.msra.mxu0 0
    %585 = vmatpush.bf16.msra.mxu0 0
    %586 = vmatpush.bf16.msra.mxu0 0
    %587 = vmatpush.bf16.msra.mxu0 0
    %588 = vmatpush.bf16.msra.mxu0 0
    %589 = vmatpush.bf16.msra.mxu0 0
    %590 = vmatpush.bf16.msra.mxu0 0
    %591 = vmatpush.bf16.msra.mxu0 %v582
    %592 = vmatmul.bf16.gmra.mxu0 %v579
    %v593 = vpop.f32.mrf.mxu0
    %v594 = vadd.f32 0.0, %v593
    %v595 = vpop.f32.mrf.mxu0
    %596 = vdwg.mxu0
    %597 = vrot.lane.b32.xlu0 %v177, 40
    %v598 = vpop.permute.xlu0 %597
    %v600 = vsel %vm155, %v575, 0
    %v603 = vsel %vm232, %v598, 0
    %605 = vmatpush.bf16.msra.mxu0 0
    %606 = vmatpush.bf16.msra.mxu0 0
    %607 = vmatpush.bf16.msra.mxu0 0
    %608 = vmatpush.bf16.msra.mxu0 0
    %609 = vmatpush.bf16.msra.mxu0 0
    %610 = vmatpush.bf16.msra.mxu0 0
    %611 = vmatpush.bf16.msra.mxu0 0
    %612 = vmatpush.bf16.msra.mxu0 %v603
    %613 = vmatmul.bf16.gmra.mxu0 %v600
    %v614 = vpop.f32.mrf.mxu0
    %v615 = vadd.f32 0.0, %v614
    %v616 = vpop.f32.mrf.mxu0
    %617 = vdwg.mxu0
    %620 = vrot.lane.b32.xlu0 %v362, 8
    %v621 = vpop.permute.xlu0 %620
    %622 = vrot.lane.b32.xlu0 %v383, 8
    %v623 = vpop.permute.xlu0 %622
    %628 = vrot.lane.b32.xlu0 %v478, 16
    %v629 = vpop.permute.xlu0 %628
    %630 = vrot.lane.b32.xlu0 %v499, 16
    %v631 = vpop.permute.xlu0 %630
    %636 = vrot.lane.b32.xlu0 %v594, 24
    %v637 = vpop.permute.xlu0 %636
    %638 = vrot.lane.b32.xlu0 %v615, 24
    %v639 = vpop.permute.xlu0 %638
    %v642 = vsel %vm155, %v246, %v621
    %v643 = vsel %vm155, %v267, %v623
    %vm644 = vcmask 130048
    %v645 = vsel %vm644, %v642, %v629
    %v646 = vsel %vm644, %v643, %v631
    %vm647 = vcmask 195584
    %v648 = vsel %vm647, %v645, %v637
    %v649 = vsel %vm647, %v646, %v639
    %v650 = vpack.c.bf16 %v649, %v648
    %v651 = vld [vmem:[%s2] sm:$0xf]
    %v652 = vld [vmem:[%s2 + $0x4] sm:$0xf]
    %v653 = vld [vmem:[%s2 + $0x8] sm:$0xf]
    %v654 = vld [vmem:[%s2 + $0xc] sm:$0xf]
    %v655 = vld [vmem:[%s3] sm:$0x1]
    %v657 = vperm.slane %v655, 0
    %v663 = vunpack.c.l.b16 %v651
    %v664 = vunpack.c.l.b16 %v652
    %v665 = vunpack.c.l.b16 %v653
    %v666 = vunpack.c.l.b16 %v654
    %v667 = vpack.c.b16 %v664, %v663
    %v668 = vpack.c.b16 %v666, %v665
    %v672 = vsel %vm47, %v650, 0
    %674 = vmatpush.bf16.msra.mxu0 0
    %675 = vmatpush.bf16.msra.mxu0 0
    %676 = vmatpush.bf16.msra.mxu0 0
    %677 = vmatpush.bf16.msra.mxu0 0
    %678 = vmatpush.bf16.msra.mxu0 0
    %679 = vmatpush.bf16.msra.mxu0 0
    %680 = vmatpush.bf16.msra.mxu0 %v668
    %681 = vmatpush.bf16.msra.mxu0 %v667
    %682 = vmatmul.bf16.gmra.mxu0 %v672
    %v683 = vpop.f32.mrf.mxu0
    %v684 = vadd.f32 %v657, %v683
    %v685 = vpop.f32.mrf.mxu0
    %v686 = vadd.f32 %v657, %v685
    %687 = vdwg.mxu0
    %v688 = vadd.f32 %v43, %v684
    %v689 = vadd.f32 %v44, %v686
    %v690 = vld [vmem:[%s10] sm:$0x1]
    %v691 = vld [vmem:[%s11] sm:$0x1]
    %v692 = vsel %vm47, %v688, 0.0
    %693 = vadd.xlane.f32.xlu0 %v692
    %v694 = vpop.xlane.xlu0 %693
    %v695 = vsel %vm47, %v689, 0.0
    %696 = vadd.xlane.f32.xlu0 %v695
    %v697 = vpop.xlane.xlu0 %696
    %v698 = vmul.f32 %v694, %v60
    %v699 = vmul.f32 %v697, %v60
    %v700 = vsub.f32 %v688, %v698
    %v701 = vsub.f32 %v689, %v699
    %v702 = vmul.f32 %v700, %v700
    %v703 = vmul.f32 %v701, %v701
    %v704 = vsel %vm47, %v702, 0.0
    %705 = vadd.xlane.f32.xlu0 %v704
    %v706 = vpop.xlane.xlu0 %705
    %v707 = vsel %vm47, %v703, 0.0
    %708 = vadd.xlane.f32.xlu0 %v707
    %v709 = vpop.xlane.xlu0 %708
    %v710 = vmul.f32 %v706, %v60
    %v711 = vmul.f32 %v709, %v60
    %v712 = vadd.f32 %v710, 1e-05
    %v713 = vadd.f32 %v711, 1e-05
    %v714 = vrsqrt.pop %v712
    %v715 = vmul.f32 %v714, %v712
    %v716 = vmul.f32 %v715, %v714
    %v717 = vmul.f32 0.5, %v716
    %v718 = vsub.f32 1.5, %v717
    %v719 = vmul.f32 %v714, %v718
    %vm720 = vweird.f32 %v712
    %vm721 = vweird.f32 %v714
    %vm722 = vmor %vm720, %vm721
    %v723 = vsel %vm722, %v714, %v719
    %v724 = vrsqrt.pop %v713
    %v725 = vmul.f32 %v724, %v713
    %v726 = vmul.f32 %v725, %v724
    %v727 = vmul.f32 0.5, %v726
    %v728 = vsub.f32 1.5, %v727
    %v729 = vmul.f32 %v724, %v728
    %vm730 = vweird.f32 %v713
    %vm731 = vweird.f32 %v724
    %vm732 = vmor %vm730, %vm731
    %v733 = vsel %vm732, %v724, %v729
    %v734 = vmul.f32 %v700, %v723
    %v735 = vmul.f32 %v701, %v733
    %v737 = vperm.slane %v690, 0
    %v739 = vmul.f32 %v734, %v737
    %v740 = vmul.f32 %v735, %v737
    %v742 = vperm.slane %v691, 0
    %v744 = vadd.f32 %v739, %v742
    %v745 = vadd.f32 %v740, %v742
    %v746 = vpack.c.bf16 %v745, %v744
    %v747 = vld [vmem:[%s4] sm:$0xf]
    %v748 = vld [vmem:[%s4 + $0x4] sm:$0xf]
    %v749 = vld [vmem:[%s4 + $0x8] sm:$0xf]
    %v750 = vld [vmem:[%s4 + $0xc] sm:$0xf]
    %v751 = vld [vmem:[%s5] sm:$0x1]
    %v753 = vperm.slane %v751, 0
    %v759 = vunpack.c.l.b16 %v747
    %v760 = vunpack.c.l.b16 %v748
    %v761 = vunpack.c.l.b16 %v749
    %v762 = vunpack.c.l.b16 %v750
    %v763 = vpack.c.b16 %v760, %v759
    %v764 = vpack.c.b16 %v762, %v761
    %v768 = vsel %vm47, %v746, 0
    %770 = vmatpush.bf16.msra.mxu0 0
    %771 = vmatpush.bf16.msra.mxu0 0
    %772 = vmatpush.bf16.msra.mxu0 0
    %773 = vmatpush.bf16.msra.mxu0 0
    %774 = vmatpush.bf16.msra.mxu0 0
    %775 = vmatpush.bf16.msra.mxu0 0
    %776 = vmatpush.bf16.msra.mxu0 %v764
    %777 = vmatpush.bf16.msra.mxu0 %v763
    %778 = vmatmul.bf16.gmra.mxu0 %v768
    %v779 = vpop.f32.mrf.mxu0
    %v780 = vadd.f32 %v753, %v779
    %v781 = vpop.f32.mrf.mxu0
    %v782 = vadd.f32 %v753, %v781
    %783 = vdwg.mxu0
    %v784 = vpack.c.bf16 %v780, %v780
    %v785 = vpack.c.bf16 %v782, %v782
    %v786 = vunpack.c.l.bf16 %v784
    %v787 = vunpack.c.l.bf16 %v785
    %v788 = vmul.f32 %v786, 0.5
    %v789 = vmul.f32 %v787, 0.5
    %v790 = vpack.c.bf16 %v788, %v788
    %v791 = vpack.c.bf16 %v789, %v789
    %v792 = vmul.f32 %v786, %v786
    %v793 = vmul.f32 %v787, %v787
    %v794 = vpack.c.bf16 %v792, %v792
    %v795 = vpack.c.bf16 %v793, %v793
    %v796 = vunpack.c.l.bf16 %v794
    %v797 = vunpack.c.l.bf16 %v795
    %v798 = vmul.f32 %v786, %v796
    %v799 = vmul.f32 %v787, %v797
    %v800 = vpack.c.bf16 %v798, %v798
    %v801 = vpack.c.bf16 %v799, %v799
    %v802 = vunpack.c.l.bf16 %v800
    %v803 = vunpack.c.l.bf16 %v801
    %v804 = vmul.f32 %v802, 0.044677734
    %v805 = vmul.f32 %v803, 0.044677734
    %v806 = vpack.c.bf16 %v804, %v804
    %v807 = vpack.c.bf16 %v805, %v805
    %v808 = vunpack.c.l.bf16 %v806
    %v809 = vunpack.c.l.bf16 %v807
    %v810 = vadd.f32 %v786, %v808
    %v811 = vadd.f32 %v787, %v809
    %v812 = vpack.c.bf16 %v810, %v810
    %v813 = vpack.c.bf16 %v811, %v811
    %v814 = vunpack.c.l.bf16 %v812
    %v815 = vunpack.c.l.bf16 %v813
    %v816 = vmul.f32 %v814, 0.796875
    %v817 = vmul.f32 %v815, 0.796875
    %v818 = vpack.c.bf16 %v816, %v816
    %v819 = vpack.c.bf16 %v817, %v817
    %v820 = vunpack.c.l.bf16 %v818
    %v821 = vunpack.c.l.bf16 %v819
    %v822 = vtanh.pop %v820
    %v823 = vtanh.pop %v821
    %v824 = vpack.c.bf16 %v822, %v822
    %v825 = vpack.c.bf16 %v823, %v823
    %v826 = vunpack.c.l.bf16 %v824
    %v827 = vunpack.c.l.bf16 %v825
    %v828 = vadd.f32 %v826, 1.0
    %v829 = vadd.f32 %v827, 1.0
    %v830 = vpack.c.bf16 %v828, %v828
    %v831 = vpack.c.bf16 %v829, %v829
    %v832 = vunpack.c.l.bf16 %v790
    %v833 = vunpack.c.l.bf16 %v791
    %v834 = vunpack.c.l.bf16 %v830
    %v835 = vunpack.c.l.bf16 %v831
    %v836 = vmul.f32 %v832, %v834
    %v837 = vmul.f32 %v833, %v835
    %v838 = vpack.c.bf16 %v837, %v836
    %v839 = vld [vmem:[%s6] sm:$0xf]
    %v840 = vld [vmem:[%s6 + $0x4] sm:$0xf]
    %v841 = vld [vmem:[%s6 + $0x8] sm:$0xf]
    %v842 = vld [vmem:[%s6 + $0xc] sm:$0xf]
    %v843 = vld [vmem:[%s6 + $0x10] sm:$0xf]
    %v844 = vld [vmem:[%s6 + $0x14] sm:$0xf]
    %v845 = vld [vmem:[%s6 + $0x18] sm:$0xf]
    %v846 = vld [vmem:[%s6 + $0x1c] sm:$0xf]
    %v847 = vld [vmem:[%s6 + $0x20] sm:$0xf]
    %v848 = vld [vmem:[%s6 + $0x24] sm:$0xf]
    %v849 = vld [vmem:[%s6 + $0x28] sm:$0xf]
    %v850 = vld [vmem:[%s6 + $0x2c] sm:$0xf]
    %v851 = vld [vmem:[%s6 + $0x30] sm:$0xf]
    %v852 = vld [vmem:[%s6 + $0x34] sm:$0xf]
    %v853 = vld [vmem:[%s6 + $0x38] sm:$0xf]
    %v854 = vld [vmem:[%s6 + $0x3c] sm:$0xf]
    %v855 = vld [vmem:[%s7] sm:$0x1]
    %v857 = vperm.slane %v855, 0
    %v875 = vunpack.c.l.b16 %v839
    %v876 = vunpack.c.l.b16 %v840
    %v877 = vunpack.c.l.b16 %v841
    %v878 = vunpack.c.l.b16 %v842
    %v879 = vunpack.c.l.b16 %v843
    %v880 = vunpack.c.l.b16 %v844
    %v881 = vunpack.c.l.b16 %v845
    %v882 = vunpack.c.l.b16 %v846
    %v883 = vunpack.c.l.b16 %v847
    %v884 = vunpack.c.l.b16 %v848
    %v885 = vunpack.c.l.b16 %v849
    %v886 = vunpack.c.l.b16 %v850
    %v887 = vunpack.c.l.b16 %v851
    %v888 = vunpack.c.l.b16 %v852
    %v889 = vunpack.c.l.b16 %v853
    %v890 = vunpack.c.l.b16 %v854
    %v891 = vpack.c.b16 %v876, %v875
    %v892 = vpack.c.b16 %v878, %v877
    %v893 = vpack.c.b16 %v880, %v879
    %v894 = vpack.c.b16 %v882, %v881
    %v895 = vpack.c.b16 %v884, %v883
    %v896 = vpack.c.b16 %v886, %v885
    %v897 = vpack.c.b16 %v888, %v887
    %v898 = vpack.c.b16 %v890, %v889
    %907 = vmatpush.bf16.msra.mxu0 %v898
    %908 = vmatpush.bf16.msra.mxu0 %v897
    %909 = vmatpush.bf16.msra.mxu0 %v896
    %910 = vmatpush.bf16.msra.mxu0 %v895
    %911 = vmatpush.bf16.msra.mxu0 %v894
    %912 = vmatpush.bf16.msra.mxu0 %v893
    %913 = vmatpush.bf16.msra.mxu0 %v892
    %914 = vmatpush.bf16.msra.mxu0 %v891
    %915 = vmatmul.bf16.gmra.mxu0 %v838
    %v916 = vpop.f32.mrf.mxu0
    %v917 = vadd.f32 %v857, %v916
    %v918 = vpop.f32.mrf.mxu0
    %v919 = vadd.f32 %v857, %v918
    %920 = vdwg.mxu0
    %v921 = vadd.f32 %v688, %v917
    %v922 = vadd.f32 %v689, %v919
    %923 = vst.msk [vmem:[#allocation2] sm:$0xff] %vm47, %v921
    %924 = vst.msk [vmem:[#allocation2 + $0x8] sm:$0xff] %vm47, %v922
    // Predicated region
    $region50: #{tpu_custom_call.1} parent=1 // pred_check
      _
    $region51: #{tpu_custom_call.1} parent=1 // pred_check_branch
      %926 = sbr.rel (0) target = $region53
    $region52: #{tpu_custom_call.1} parent=1 // pred_region
      %928 = vsyncadd [#allocation3], 0
      %s929 = sshll.u32 [#allocation2], 4
      %s930 = int_to_ptr.vmem [resolvable:$true] %s929
      %s931 = sshll.u32 %s12, 4
      %s932 = int_to_ptr.hbm [resolvable:$true] %s931
      %937 = dma.vmem_to_hbm [thread:$0]  %s930, 256, %s932, [#allocation3], 128, 128, 8
    $region53: #{tpu_custom_call.1} parent=1 // pred_fallthru
      _
    // Predicated region
    $region54: #{tpu_custom_call.1} parent=1 // pred_check
      _
    $region55: #{tpu_custom_call.1} parent=1 // pred_check_branch
      %939 = sbr.rel (0) target = $region57
    $region56: #{tpu_custom_call.1} parent=1 // pred_region
      %941 = dma.done [#allocation3], 256
    $region57: #{tpu_custom_call.1} parent=1 // pred_fallthru
      _
    %942 = vsyncpa [#allocation3], 1

</llo_original>
